<compile_context>
chip_gen: v7x
topology: tpu7x:2x2x1
jax: 0.10.0
libtpu: 0.0.40
codegen_flags: <defaults>
</compile_context>

<pallas_src>
import math
import functools

import jax
import jax.numpy as jnp
from jax import lax
from jax.experimental import pallas as pl
from jax.experimental.pallas import tpu as pltpu


# ---------------------------------------------------------------------------
# Generation-aware VMEM budget
# ---------------------------------------------------------------------------
def _vmem_budget():
    """Usable VMEM (bytes): physical capacity minus headroom for compiler scratch."""
    cap = 64 * 1024 * 1024  # conservative default (v7x per-TC VMEM)
    try:
        info = pltpu.get_tpu_info()
        cap = int(getattr(info, "vmem_capacity_bytes", cap))
    except Exception:
        pass
    return int(max(cap - 16 * 1024 * 1024, 32 * 1024 * 1024))


def _pick_tile(dim, target, align):
    """Largest multiple of `align` that divides `dim` and is <= target, else `dim`.

    Returning `dim` (full extent) is always legal for the (8,128) block rule.
    """
    if dim <= target:
        return dim
    t = (target // align) * align
    while t >= align:
        if dim % t == 0:
            return t
        t -= align
    return dim


# ---------------------------------------------------------------------------
# Tiled linear kernels: y = x @ Wt + b   (x: (M,K), Wt: (K,N) bf16, b: (1,N) f32)
# ---------------------------------------------------------------------------
def _linear_acc_kernel(x_ref, w_ref, b_ref, o_ref, acc_ref):
    @pl.when(pl.program_id(2) == 0)
    def _init():
        acc_ref[...] = jnp.zeros_like(acc_ref)

    # bf16 operands -> native bf16 MXU path; f32 accumulation.
    acc_ref[...] += jnp.dot(x_ref[...].astype(jnp.bfloat16), w_ref[...],
                            preferred_element_type=jnp.float32)

    @pl.when(pl.program_id(2) == pl.num_programs(2) - 1)
    def _finalize():
        o_ref[...] = (acc_ref[...] + b_ref[...].astype(jnp.float32)).astype(o_ref.dtype)


def _linear_simple_kernel(x_ref, w_ref, b_ref, o_ref):
    # Single K step: no scratch accumulator, no init/finalize branches.
    acc = jnp.dot(x_ref[...].astype(jnp.bfloat16), w_ref[...],
                  preferred_element_type=jnp.float32)
    o_ref[...] = (acc + b_ref[...].astype(jnp.float32)).astype(o_ref.dtype)


def linear(x2d, wt, b, *, out_dtype=None):
    """nn.Linear semantics with pre-transposed (in, out) bf16 weight `wt`."""
    M, K = x2d.shape
    N = wt.shape[1]
    out_dtype = out_dtype or x2d.dtype
    budget = _vmem_budget()
    xb = jnp.dtype(x2d.dtype).itemsize
    wb = jnp.dtype(wt.dtype).itemsize
    ob = jnp.dtype(out_dtype).itemsize
    b2 = b.reshape(1, N).astype(jnp.float32)

    def est(tm_, tn_, tk_):
        # double-buffered input/output blocks + f32 accumulator
        return (2 * tm_ * tk_ * xb + 2 * tk_ * tn_ * wb + 2 * tm_ * tn_ * ob
                + tm_ * tn_ * 4 + 2 * tn_ * 4)

    tm = _pick_tile(M, 256, 8)
    tn = tk = None
    # Prefer the full output width (activation tile read from HBM only once).
    for tn_t in (N, 1024, 512, 256, 128):
        tn_c = _pick_tile(N, tn_t, 128)
        for tk_t in (1024, 512, 256, 128):
            tk_c = _pick_tile(K, tk_t, 128)
            if est(tm, tn_c, tk_c) <= 0.7 * budget:
                tn, tk = tn_c, tk_c
                break
        if tn is not None:
            break
    if tn is None:
        tn, tk = _pick_tile(N, 128, 128), _pick_tile(K, 128, 128)

    kn = K // tk
    out_shape = jax.ShapeDtypeStruct((M, N), out_dtype)

    if kn == 1:
        return pl.pallas_call(
            _linear_simple_kernel,
            out_shape=out_shape,
            grid=(M // tm, N // tn),
            in_specs=[
                pl.BlockSpec((tm, tk), lambda i, j: (i, 0)),
                pl.BlockSpec((tk, tn), lambda i, j: (0, j)),
                pl.BlockSpec((1, tn), lambda i, j: (0, j)),
            ],
            out_specs=pl.BlockSpec((tm, tn), lambda i, j: (i, j)),
            compiler_params=pltpu.CompilerParams(
                dimension_semantics=("parallel", "parallel"),
                vmem_limit_bytes=budget,
            ),
        )(x2d, wt, b2)

    return pl.pallas_call(
        _linear_acc_kernel,
        out_shape=out_shape,
        grid=(M // tm, N // tn, kn),
        in_specs=[
            pl.BlockSpec((tm, tk), lambda i, j, k: (i, k)),
            pl.BlockSpec((tk, tn), lambda i, j, k: (k, j)),
            pl.BlockSpec((1, tn), lambda i, j, k: (0, j)),
        ],
        out_specs=pl.BlockSpec((tm, tn), lambda i, j, k: (i, j)),
        scratch_shapes=[pltpu.VMEM((tm, tn), jnp.float32)],
        compiler_params=pltpu.CompilerParams(
            dimension_semantics=("parallel", "parallel", "arbitrary"),
            vmem_limit_bytes=budget,
        ),
    )(x2d, wt, b2)


# ---------------------------------------------------------------------------
# Attention kernel: one (batch, head-group, q-tile) per grid step.
# ---------------------------------------------------------------------------
_MASK_FILL = float(jnp.finfo(jnp.float32).min)  # finite "-inf": exp underflows to
# exactly 0 for partially-masked rows (identical to -inf), but fully-masked rows
# degrade to a uniform distribution instead of NaN.


def _attention_kernel(*refs, has_mask, scale):
    if has_mask:
        q_ref, k_ref, v_ref, m_ref, ctx_ref, attn_ref = refs
    else:
        q_ref, k_ref, v_ref, ctx_ref, attn_ref = refs
        m_ref = None

    q = q_ref[0]          # (g, TQ, dk)
    k = k_ref[0]          # (g, Lk, dk)
    v = v_ref[0]          # (g, Lk, dk)
    if scale != 1.0:
        # Only when the caller did not fold the scale into the Q projection;
        # scaling q (g*TQ*dk) is Lk/dk x cheaper than scaling the scores.
        q = q * scale

    # scores = Q @ K^T, batched over the head-group; contracting the last dim of
    # both operands avoids an explicit XLU transpose of K.  f32 accumulation.
    s = lax.dot_general(q, k, (((2,), (2,)), ((0,), (0,))),
                        preferred_element_type=jnp.float32)      # (g, TQ, Lk)

    if m_ref is not None:
        s = jnp.where(m_ref[0] != 0, _MASK_FILL, s)              # masked_fill_

    # numerically-stable softmax over the key axis, all in f32
    row_max = jnp.max(s, axis=-1, keepdims=True)
    e = jnp.exp(s - row_max)
    denom = jnp.sum(e, axis=-1, keepdims=True)
    p = e * (1.0 / denom)          # exact normalization: returned probs sum to 1

    attn_ref[0] = p.astype(attn_ref.dtype)

    # context = P @ V on the MXU (P cast to V's dtype -> bf16 path)
    o = lax.dot_general(p.astype(v.dtype), v, (((2,), (1,)), ((0,), (0,))),
                        preferred_element_type=jnp.float32)      # (g, TQ, dk)
    o = o.astype(ctx_ref.dtype)
    g_sz, _, dk_sz = o.shape
    # Write lane-dense (TQ, g*dk) into the (1, TQ, g*dk) output block via static
    # per-head column slices; the HBM writeback of the whole block is then a
    # single wide, unmasked store.
    for h in range(g_sz):
        ctx_ref[0, :, h * dk_sz:(h + 1) * dk_sz] = o[h]


def _attn_plan(nh, Lq, Lk, dk, qkv_bytes, budget, has_mask, mask_per_head):
    """Pick (heads_per_step, TQ) that fit the VMEM budget.

    heads_per_step g must satisfy g == nh or (g*dk) % 128 == 0 so the context
    output block (1, TQ, g*dk) is a legal, lane-dense block of (bs, Lq, d_model).
    """
    def footprint(g, tq):
        kv = 2 * (g * Lk * dk * qkv_bytes) * 2            # K + V, double-buffered
        qb = (g * tq * dk * qkv_bytes) * 2
        ctx = (tq * g * dk * qkv_bytes) * 2
        attn = (g * tq * Lk * 4) * 2
        msk = ((g if mask_per_head else 1) * tq * Lk * 4) * 2 if has_mask else 0
        interm = 3 * g * tq * Lk * 4                      # s / e / p live in f32
        return kv + qb + ctx + attn + msk + interm

    head_groups = [d for d in range(nh, 0, -1)
                   if nh % d == 0 and (d == nh or (d * dk) % 128 == 0)]
    align = 16 if Lq % 16 == 0 else 8
    tq_opts = []
    for t in (512, 256, 128, 64, 32, 16, 8):
        tq = _pick_tile(Lq, t, align)
        if tq not in tq_opts:
            tq_opts.append(tq)

    # Prefer a large q-tile first, then as many heads per step as fit.
    for tq in tq_opts:
        for g in head_groups:
            if footprint(g, tq) <= 0.7 * budget:
                return g, tq
    return head_groups[-1], tq_opts[-1]   # smallest valid; may spill, best effort


def scaled_dot_product_attention(q, k, v, mask=None, scale=None):
    """q,k,v: (bs, n_heads, L, d_k) head-major.

    Returns (context, attn) with context already merged lane-dense to
    (bs, Lq, d_model) and attn as (bs, n_heads, Lq, Lk) float32.
    `scale=None` applies 1/sqrt(d_k); pass scale=1.0 if it is folded into Q.
    """
    bs, nh, Lq, dk = q.shape
    Lk = k.shape[2]
    d_model = nh * dk
    if scale is None:
        scale = 1.0 / math.sqrt(dk)
    budget = _vmem_budget()

    has_mask = mask is not None
    if has_mask:
        # Keep the mask at its natural broadcastable batch/head shape -- do NOT
        # materialize a (bs, nh, Lq, Lk) int32 tensor in HBM.
        m = jnp.asarray(mask)
        if m.ndim < 4:
            m = m.reshape((1,) * (4 - m.ndim) + m.shape)
        if m.shape[2] != Lq or m.shape[3] != Lk:
            m = jnp.broadcast_to(m, (m.shape[0], m.shape[1], Lq, Lk))
        if m.shape[0] not in (1, bs) or m.shape[1] not in (1, nh):
            m = jnp.broadcast_to(m, (bs, nh, Lq, Lk))
        m = m.astype(jnp.int32)
        mb, mh = m.shape[0], m.shape[1]
    else:
        mb = mh = 1

    qkv_bytes = jnp.dtype(q.dtype).itemsize
    g, TQ = _attn_plan(nh, Lq, Lk, dk, qkv_bytes, budget, has_mask, mh == nh)
    grid = (bs, nh // g, Lq // TQ)

    kernel = functools.partial(_attention_kernel, has_mask=has_mask, scale=scale)

    # K/V index_maps ignore the (innermost) q-tile axis, so they are DMA'd only
    # when the batch/head-group changes.
    # TODO(synk): use pipeline_mode=pl.Buffered(1) on the K/V specs once stable,
    # to avoid holding two identical copies of the K/V blocks in VMEM.
    in_specs = [
        pl.BlockSpec((1, g, TQ, dk), lambda b, h, qi: (b, h, qi, 0)),
        pl.BlockSpec((1, g, Lk, dk), lambda b, h, qi: (b, h, 0, 0)),
        pl.BlockSpec((1, g, Lk, dk), lambda b, h, qi: (b, h, 0, 0)),
    ]
    args = [q, k, v]
    if has_mask:
        mg = g if mh == nh else 1
        if mb > 1 and mh > 1:
            m_map = lambda b, h, qi: (b, h, qi, 0)
        elif mb > 1:
            m_map = lambda b, h, qi: (b, 0, qi, 0)
        elif mh > 1:
            m_map = lambda b, h, qi: (0, h, qi, 0)
        else:
            m_map = lambda b, h, qi: (0, 0, qi, 0)
        in_specs.append(pl.BlockSpec((1, mg, TQ, Lk), m_map))
        args.append(m)

    # TODO(synk): for long sequences where the caller does not need the full
    # attention matrix, switch to a flash-style KV-tiled online-softmax kernel;
    # the module API requires returning (bs, nh, Lq, Lk), so full score rows are
    # materialized per (batch, head-group, q-tile) here.
    ctx, attn = pl.pallas_call(
        kernel,
        out_shape=(
            jax.ShapeDtypeStruct((bs, Lq, d_model), q.dtype),      # lane-dense context
            jax.ShapeDtypeStruct((bs, nh, Lq, Lk), jnp.float32),   # attention probs
        ),
        grid=grid,
        in_specs=in_specs,
        out_specs=(
            pl.BlockSpec((1, TQ, g * dk), lambda b, h, qi: (b, qi, h)),
            pl.BlockSpec((1, g, TQ, Lk), lambda b, h, qi: (b, h, qi, 0)),
        ),
        compiler_params=pltpu.CompilerParams(
            dimension_semantics=("parallel", "parallel", "parallel"),
            vmem_limit_bytes=budget,
        ),
    )(*args)
    return ctx, attn


# ---------------------------------------------------------------------------
# MultiHeadAttention module (JAX wrapper around the Pallas kernels)
# ---------------------------------------------------------------------------
class MultiHeadAttention:
    def __init__(self, d_model, n_heads, key):
        assert d_model % n_heads == 0
        self.d_model = d_model
        self.n_heads = n_heads
        self.d_k = d_model // n_heads
        scale = 1.0 / math.sqrt(self.d_k)

        ks = jax.random.split(key, 8)
        bound = 1.0 / math.sqrt(d_model)
        init_w = lambda k: jax.random.uniform(
            k, (d_model, d_model), jnp.float32, -bound, bound)
        init_b = lambda k: jax.random.uniform(
            k, (d_model,), jnp.float32, -bound, bound)
        # Master f32 parameters in nn.Linear layout (out_features, in_features).
        self.q_w, self.q_b = init_w(ks[0]), init_b(ks[1])
        self.k_w, self.k_b = init_w(ks[2]), init_b(ks[3])
        self.v_w, self.v_b = init_w(ks[4]), init_b(ks[5])
        self.o_w, self.o_b = init_w(ks[6]), init_b(ks[7])

        # Kernel-side parameters: pre-transposed to (in, out), 1/sqrt(d_k) folded
        # into the Q projection (free scaling), and weights stored in bf16 so the
        # MXU runs its native bf16 path and weight HBM traffic is halved.
        # Biases stay f32 (added once after the f32 accumulation).
        q_wt_s = self.q_w.T * scale
        self.q_b_s = self.q_b * scale
        self.q_wt = q_wt_s.astype(jnp.bfloat16)
        self.k_wt = self.k_w.T.astype(jnp.bfloat16)
        self.v_wt = self.v_w.T.astype(jnp.bfloat16)
        self.o_wt = self.o_w.T.astype(jnp.bfloat16)
        self.qkv_wt = jnp.concatenate(
            [q_wt_s, self.k_w.T, self.v_w.T], axis=1).astype(jnp.bfloat16)
        self.qkv_b = jnp.concatenate([self.q_b_s, self.k_b, self.v_b], axis=0)
        self.kv_wt = jnp.concatenate(
            [self.k_w.T, self.v_w.T], axis=1).astype(jnp.bfloat16)
        self.kv_b = jnp.concatenate([self.k_b, self.v_b], axis=0)

    def __call__(self, query, key, value, mask=None):
        bs, q_len, d_model = query.shape
        _, k_len, _ = key.shape
        nh, dk = self.n_heads, self.d_k

        def split_heads(x2d, L):
            # TODO(synk): fold this head-split transpose into the projection
            # kernel's out_spec (head-major output blocks); kept as an XLA op
            # (now in bf16, half-cost) because the attention grid's head-group
            # tiling needs head-major q/k/v layout.
            return x2d.reshape(bs, L, nh, dk).transpose(0, 2, 1, 3)

        if (query is key) and (key is value):
            # Self-attention: one fused QKV matmul -> activations read once.
            qkv = linear(query.reshape(bs * q_len, d_model), self.qkv_wt,
                         self.qkv_b, out_dtype=jnp.bfloat16)
            q = split_heads(qkv[:, :d_model], q_len)
            k = split_heads(qkv[:, d_model:2 * d_model], q_len)
            v = split_heads(qkv[:, 2 * d_model:], q_len)
        elif key is value:
            # Cross-attention: fuse the K/V projections (same input tensor).
            q = split_heads(linear(query.reshape(bs * q_len, d_model), self.q_wt,
                                   self.q_b_s, out_dtype=jnp.bfloat16), q_len)
            kv = linear(key.reshape(bs * k_len, d_model), self.kv_wt,
                        self.kv_b, out_dtype=jnp.bfloat16)
            k = split_heads(kv[:, :d_model], k_len)
            v = split_heads(kv[:, d_model:], k_len)
        else:
            q = split_heads(linear(query.reshape(bs * q_len, d_model), self.q_wt,
                                   self.q_b_s, out_dtype=jnp.bfloat16), q_len)
            k = split_heads(linear(key.reshape(bs * k_len, d_model), self.k_wt,
                                   self.k_b, out_dtype=jnp.bfloat16), k_len)
            v = split_heads(linear(value.reshape(bs * k_len, d_model), self.v_wt,
                                   self.v_b, out_dtype=jnp.bfloat16), k_len)

        # q already carries the 1/sqrt(d_k) factor -> scale=1.0.
        ctx, attn = scaled_dot_product_attention(q, k, v, mask, scale=1.0)

        # ctx is already (bs, q_len, d_model) lane-dense -> straight into out_linear.
        out = linear(ctx.reshape(bs * q_len, d_model), self.o_wt, self.o_b,
                     out_dtype=jnp.float32)
        return out.reshape(bs, q_len, d_model), attn


# ---------------------------------------------------------------------------
# Pure-JAX f32 reference (for a sanity check)
# ---------------------------------------------------------------------------
def reference_mha(mha, query, key, value, mask=None):
    bs, q_len, d_model = query.shape
    _, k_len, _ = key.shape
    nh = mha.n_heads
    dk = d_model // nh
    lin = lambda x, w, b: x @ w.T + b
    q = lin(query, mha.q_w, mha.q_b).reshape(bs, q_len, nh, dk).transpose(0, 2, 1, 3)
    k = lin(key, mha.k_w, mha.k_b).reshape(bs, k_len, nh, dk).transpose(0, 2, 1, 3)
    v = lin(value, mha.v_w, mha.v_b).reshape(bs, k_len, nh, dk).transpose(0, 2, 1, 3)
    s = jnp.einsum("bhqd,bhkd->bhqk", q, k) / math.sqrt(dk)
    if mask is not None:
        s = jnp.where(jnp.broadcast_to(mask, s.shape), -jnp.inf, s)
    p = jax.nn.softmax(s, axis=-1)
    o = jnp.einsum("bhqk,bhkd->bhqd", p, v)
    o = o.transpose(0, 2, 1, 3).reshape(bs, q_len, d_model)
    o = lin(o, mha.o_w, mha.o_b)
    return o, p


# ---------------------------------------------------------------------------
if __name__ == "__main__":
    d_model = 32
    n_heads = 4
    bs = 2
    q_len = 8
    k_len = 8

    root = jax.random.PRNGKey(0)
    k_params, k_x, k_kv = jax.random.split(root, 3)

    mha = MultiHeadAttention(d_model, n_heads, k_params)

    # --- case 1: self-attention (fused QKV path, no mask) -------------------
    x = jax.random.normal(k_x, (bs, q_len, d_model), jnp.float32)
    out, attn = mha(x, x, x)
    out = jax.block_until_ready(out)
    attn = jax.block_until_ready(attn)

    ref_out, ref_attn = reference_mha(mha, x, x, x)
    assert out.shape == (bs, q_len, d_model)
    assert attn.shape == (bs, n_heads, q_len, q_len)
    # Tolerances account for bf16 matmul operands (f32 accumulation).
    assert jnp.allclose(out, ref_out, atol=5e-2, rtol=5e-2), \
        float(jnp.max(jnp.abs(out - ref_out)))
    assert jnp.allclose(attn, ref_attn, atol=2e-2, rtol=2e-2), \
        float(jnp.max(jnp.abs(attn - ref_attn)))

    # --- case 2: cross-attention (fused KV path) with a boolean mask --------
    kv_in = jax.random.normal(k_kv, (bs, k_len, d_model), jnp.float32)
    causal_mask = jnp.triu(jnp.ones((q_len, k_len), jnp.int32), k=1).astype(bool)
    causal_mask = causal_mask[None, None]   # broadcastable to (bs, nh, Lq, Lk)

    out_m, attn_m = mha(x, kv_in, kv_in, mask=causal_mask)
    out_m = jax.block_until_ready(out_m)
    attn_m = jax.block_until_ready(attn_m)

    ref_out_m, ref_attn_m = reference_mha(mha, x, kv_in, kv_in, mask=causal_mask)
    assert jnp.allclose(out_m, ref_out_m, atol=5e-2, rtol=5e-2), \
        float(jnp.max(jnp.abs(out_m - ref_out_m)))
    assert jnp.allclose(attn_m, ref_attn_m, atol=2e-2, rtol=2e-2), \
        float(jnp.max(jnp.abs(attn_m - ref_attn_m)))

    print("KERNEL_OK")
</pallas_src>

<mosaic_0001>
module attributes {stable_mosaic.version = 11 : i64} {
  func.func @_linear_simple_kernel(%arg0: i32, %arg1: i32, %arg2: memref<16x32xf32, #tpu.memory_space<vmem>>, %arg3: memref<32x96xbf16, #tpu.memory_space<vmem>>, %arg4: memref<1x96xf32, #tpu.memory_space<vmem>>, %arg5: memref<16x96xbf16, #tpu.memory_space<vmem>>) attributes {dimension_semantics = [#tpu.dimension_semantics<parallel>, #tpu.dimension_semantics<parallel>], iteration_bounds = array<i64: 1, 1>, scalar_prefetch = 0 : i64, scratch_operands = 0 : i64, tpu.core_type = #tpu.core_type<tc>, window_params = [{transform_indices = @transform_0, window_bounds = array<i64: 16, 32>}, {transform_indices = @transform_1, window_bounds = array<i64: 32, 96>}, {transform_indices = @transform_2, window_bounds = array<i64: 1, 96>}, {transform_indices = @transform_3, window_bounds = array<i64: 16, 96>}]} {
    %c0 = arith.constant 0 : index
    %c0_0 = arith.constant 0 : index
    %0 = vector.load %arg2[%c0, %c0_0] : memref<16x32xf32, #tpu.memory_space<vmem>>, vector<16x32xf32>
    %1 = arith.truncf %0 : vector<16x32xf32> to vector<16x32xbf16>
    %c0_1 = arith.constant 0 : index
    %c0_2 = arith.constant 0 : index
    %2 = vector.load %arg3[%c0_1, %c0_2] : memref<32x96xbf16, #tpu.memory_space<vmem>>, vector<32x96xbf16>
    %cst = arith.constant dense<0.000000e+00> : vector<16x96xf32>
    %3 = tpu.matmul %1, %2, %cst {dimension_numbers = #tpu.dot_dimension_numbers<[1], [0], [0], [1], [0, 0, 1, 1], [], []>} : vector<16x32xbf16>, vector<32x96xbf16>, vector<16x96xf32> -> vector<16x96xf32>
    %c0_3 = arith.constant 0 : index
    %c0_4 = arith.constant 0 : index
    %4 = vector.load %arg4[%c0_3, %c0_4] : memref<1x96xf32, #tpu.memory_space<vmem>>, vector<1x96xf32>
    %5 = vector.broadcast %4 : vector<1x96xf32> to vector<16x96xf32>
    %6 = arith.addf %3, %5 : vector<16x96xf32>
    %7 = arith.truncf %6 : vector<16x96xf32> to vector<16x96xbf16>
    %c0_5 = arith.constant 0 : index
    %c0_6 = arith.constant 0 : index
    %8 = vector.load %arg5[%c0_5, %c0_6] : memref<16x96xbf16, #tpu.memory_space<vmem>>, vector<16x96xbf16>
    tpu.vector_store %arg5[%c0_5, %c0_6], %7 {strides = array<i32>} : memref<16x96xbf16, #tpu.memory_space<vmem>>, vector<16x96xbf16>,
    return
  }
  func.func @transform_0(%arg0: i32, %arg1: i32) -> (i32, i32) {
    %c0_i32 = arith.constant 0 : i32
    %c0_i32_0 = arith.constant 0 : i32
    return %arg0, %c0_i32 : i32, i32
  }
  func.func @transform_1(%arg0: i32, %arg1: i32) -> (i32, i32) {
    %c0_i32 = arith.constant 0 : i32
    %c0_i32_0 = arith.constant 0 : i32
    return %c0_i32, %arg1 : i32, i32
  }
  func.func @transform_2(%arg0: i32, %arg1: i32) -> (i32, i32) {
    %c0_i32 = arith.constant 0 : i32
    %c0_i32_0 = arith.constant 0 : i32
    return %c0_i32, %arg1 : i32, i32
  }
  func.func @transform_3(%arg0: i32, %arg1: i32) -> (i32, i32) {
    %c0_i32 = arith.constant 0 : i32
    return %arg0, %arg1 : i32, i32
  }
}

</mosaic_0001>

<llo_original>
// kernel: tpu_custom_call.1
$region0: #{tpu_custom_call.1}
  #allocation0 [shape = 'u32[]', space=smem, size = 0x4, offset = 0x4, fixed_abs, tag = 'smem constant byte address 0x4 - core index']
  #allocation1 [shape = 'u32[144,128]{1,0:T(1,128)}', space=vmem, size = 0x12000, scoped, tag = 'internal scratch']
  %s0 = inlined_call_operand.hbm [shape: f32[16,32], index: 0, kind: input, shape index: {}]
  %s1 = inlined_call_operand.hbm [shape: bf16[32,96], index: 1, kind: input, shape index: {}]
  %s2 = inlined_call_operand.vmem [shape: f32[1,96], index: 2, kind: input, shape index: {}]
  %s3 = inlined_call_operand.hbm [shape: bf16[16,96], index: 3, kind: output, shape index: {}]
  %s4 = sld [smem:[#allocation0]]
  $region30: #{tpu_custom_call.1} parent=0
    _
  %s6 = ssub.s32 1, %s4
  %s7 = scalar_select 0, %s6, %s4
  $region1: #{tpu_custom_call.1} parent=0
    #allocation2 [shape = 'u8[8192]{0}', space=vmem, size = 0x2000, scoped, tag = 'input window, operand 0, single buffered']
    #allocation3 [shape = 's32[1]{0}', space=sflag, size = 0x4, scoped, tag = 'scoped memory for tpu_custom_call.1']
    #allocation4 [shape = 's32[1]{0}', space=sflag, size = 0x4, scoped, tag = 'scoped memory for tpu_custom_call.1']
    #allocation5 [shape = 'u8[8192]{0}', space=vmem, size = 0x2000, scoped, tag = 'input window, operand 1, single buffered']
    #allocation6 [shape = 's32[1]{0}', space=sflag, size = 0x4, scoped, tag = 'scoped memory for tpu_custom_call.1']
    #allocation7 [shape = 'u8[4096]{0}', space=vmem, size = 0x1000, scoped, tag = 'output window, operand 0, single buffered']
    %8 = vsyncpa [#allocation3], 0
    %9 = vsyncpa [#allocation6], 0
    %10 = vsyncpa [#allocation4], 0
    // Predicated region
    $region2: #{tpu_custom_call.1} parent=1 // pred_check
      _
    $region3: #{tpu_custom_call.1} parent=1 // pred_check_branch
      %12 = sbr.rel (0) target = $region5
    $region4: #{tpu_custom_call.1} parent=1 // pred_region
      %s14 = ssub.s32 256, 256
      %15 = vsyncadd [#allocation3], %s14
      %s16 = sshll.u32 [#allocation2], 4
      %s17 = int_to_ptr.vmem [resolvable:$true] %s16
      %22 = dma.hbm_to_vmem [thread:$0]  %s0, 256, %s17, [#allocation3], 128, 128, 8
    $region5: #{tpu_custom_call.1} parent=1 // pred_fallthru
      _
    // Predicated region
    $region6: #{tpu_custom_call.1} parent=1 // pred_check
      _
    $region7: #{tpu_custom_call.1} parent=1 // pred_check_branch
      %24 = sbr.rel (0) target = $region9
    $region8: #{tpu_custom_call.1} parent=1 // pred_region
      %s26 = ssub.s32 256, 256
      %27 = vsyncadd [#allocation6], %s26
      %s28 = sshll.u32 [#allocation5], 4
      %s29 = int_to_ptr.vmem [resolvable:$true] %s28
      %34 = dma.hbm_to_vmem [thread:$0]  %s1, 256, %s29, [#allocation6], 64, 64, 4
    $region9: #{tpu_custom_call.1} parent=1 // pred_fallthru
      _
    // Predicated region
    $region10: #{tpu_custom_call.1} parent=1 // pred_check
      _
    $region11: #{tpu_custom_call.1} parent=1 // pred_check_branch
      %36 = sbr.rel (0) target = $region13
    $region12: #{tpu_custom_call.1} parent=1 // pred_region
      _
    $region13: #{tpu_custom_call.1} parent=1 // pred_fallthru
      _
    // Predicated region
    $region14: #{tpu_custom_call.1} parent=1 // pred_check
      _
    $region15: #{tpu_custom_call.1} parent=1 // pred_check_branch
      %38 = sbr.rel (0) target = $region17
    $region16: #{tpu_custom_call.1} parent=1 // pred_region
      %39 = dma.done [#allocation3], 256
    $region17: #{tpu_custom_call.1} parent=1 // pred_fallthru
      _
    // Predicated region
    $region18: #{tpu_custom_call.1} parent=1 // pred_check
      _
    $region19: #{tpu_custom_call.1} parent=1 // pred_check_branch
      %41 = sbr.rel (0) target = $region21
    $region20: #{tpu_custom_call.1} parent=1 // pred_region
      %42 = dma.done [#allocation6], 256
    $region21: #{tpu_custom_call.1} parent=1 // pred_fallthru
      _
    %v44 = vld [vmem:[#allocation2] sm:$0xff]
    %v45 = vld [vmem:[#allocation2 + $0x8] sm:$0xff]
    %v46 = vpack.c.bf16 %v45, %v44
    %v47 = vld [vmem:[#allocation5] sm:$0xf]
    %v48 = vld [vmem:[#allocation5 + $0x4] sm:$0xf]
    %v49 = vld [vmem:[#allocation5 + $0x8] sm:$0xf]
    %v50 = vld [vmem:[#allocation5 + $0xc] sm:$0xf]
    %v51 = vld [vmem:[%s2] sm:$0x1]
    %v53 = vlaneseq
    %v54 = vshrl.u32 %v53, 7
    %v55 = vsub.s32 0, %v54
    %v56 = vrot.slane %v51, %v55
    %v62 = vunpack.c.l.b16 %v47
    %v63 = vunpack.c.l.b16 %v48
    %v64 = vunpack.c.l.b16 %v49
    %v65 = vunpack.c.l.b16 %v50
    %v66 = vpack.c.b16 %v63, %v62
    %v67 = vpack.c.b16 %v65, %v64
    %vm70 = vcmask 261120
    %v72 = vsel %vm70, %v46, 0
    %74 = vmatprep.subr.bf16.mxu0 0
    %75 = vmatpush1.bf16.msra.mxu0 %v66
    %76 = vmatprep.subr.bf16.mxu0 0
    %77 = vmatpush1.bf16.msra.mxu0 %v67
    %78 = vmatprep.subr.bf16.mxu0 0
    %79 = vmatpush1.bf16.msra.mxu0 0
    %80 = vmatprep.subr.bf16.mxu0 0
    %81 = vmatpush1.bf16.msra.mxu0 0
    %82 = vmatprep.subr.bf16.mxu0 0
    %83 = vmatpush1.bf16.msra.mxu0 0
    %84 = vmatprep.subr.bf16.mxu0 0
    %85 = vmatpush1.bf16.msra.mxu0 0
    %86 = vmatprep.subr.bf16.mxu0 0
    %87 = vmatpush1.bf16.msra.mxu0 0
    %88 = vmatprep.subr.bf16.mxu0 0
    %89 = vmatpush1.bf16.msra.mxu0 0
    %90 = vmatprep.subr.bf16.mxu0 0
    %91 = vmatpush1.bf16.msra.mxu0 0
    %92 = vmatprep.subr.bf16.mxu0 0
    %93 = vmatpush1.bf16.msra.mxu0 0
    %94 = vmatprep.subr.bf16.mxu0 0
    %95 = vmatpush1.bf16.msra.mxu0 0
    %96 = vmatprep.subr.bf16.mxu0 0
    %97 = vmatpush1.bf16.msra.mxu0 0
    %98 = vmatprep.subr.bf16.mxu0 0
    %99 = vmatpush1.bf16.msra.mxu0 0
    %100 = vmatprep.subr.bf16.mxu0 0
    %101 = vmatpush1.bf16.msra.mxu0 0
    %102 = vmatprep.subr.bf16.mxu0 0
    %103 = vmatpush1.bf16.msra.mxu0 0
    %104 = vmatprep.subr.bf16.mxu0 0
    %105 = vmatpush1.bf16.msra.mxu0 0
    %106 = vmatprep.mubr.bf16.mxu0 0
    %107 = vmatmul.mubr.bf16.gmra.mrb[0].mxu0 %v72
    %v108 = vpop.f32.mrb[0].mxu0
    %v109 = vadd.f32 %v56, %v108
    %v110 = vpop.f32.mrb[0].mxu0
    %v111 = vpop.f32.mrb[0].mxu0
    %v112 = vadd.f32 %v56, %v111
    %v113 = vpop.f32.mrb[0].mxu0
    %114 = vdwg.mxu0
    %v115 = vpack.c.bf16 %v112, %v109
    %v117 = vunpack.c.l.b16 %v115
    %v118 = vunpack.c.h.b16 %v115
    %v119 = vpack.c.b16 %v117, %v117
    %v120 = vpack.c.b16 %v118, %v118
    %vm123 = vcmask 781312
    %124 = vst.msk [vmem:[#allocation7] sm:$0xf] %vm123, %v119
    %125 = vst.msk [vmem:[#allocation7 + $0x4] sm:$0xf] %vm123, %v120
    // Predicated region
    $region22: #{tpu_custom_call.1} parent=1 // pred_check
      _
    $region23: #{tpu_custom_call.1} parent=1 // pred_check_branch
      %127 = sbr.rel (0) target = $region25
    $region24: #{tpu_custom_call.1} parent=1 // pred_region
      %s129 = ssub.s32 128, 128
      %130 = vsyncadd [#allocation4], %s129
      %s131 = sshll.u32 [#allocation7], 4
      %s132 = int_to_ptr.vmem [resolvable:$true] %s131
      %137 = dma.vmem_to_hbm [thread:$0]  %s132, 128, %s3, [#allocation4], 64, 64, 4
    $region25: #{tpu_custom_call.1} parent=1 // pred_fallthru
      _
    // Predicated region
    $region26: #{tpu_custom_call.1} parent=1 // pred_check
      _
    $region27: #{tpu_custom_call.1} parent=1 // pred_check_branch
      %139 = sbr.rel (0) target = $region29
    $region28: #{tpu_custom_call.1} parent=1 // pred_region
      %140 = dma.done [#allocation4], 128
    $region29: #{tpu_custom_call.1} parent=1 // pred_fallthru
      _
    %141 = vsyncpa [#allocation3], 1
    %142 = vsyncpa [#allocation6], 1
    %143 = vsyncpa [#allocation4], 1

</llo_original>
